<compile_context>
chip_gen: v5e
topology: v5e:2x2
jax: 0.10.0
libtpu: 0.0.40
codegen_flags: <defaults>
</compile_context>

<pallas_src>
import functools

import jax
import jax.numpy as jnp
from jax.experimental import pallas as pl
from jax.experimental.pallas import tpu as pltpu


def scse_kernel(x_ref, ws_ref, g_ref, o_ref, *, use_vpu_squeeze):
    # x_ref: (1, C, T) tile; ws_ref: (C, 1) f32 or (1, C) x-dtype; g_ref: (1, C, 1) f32.
    x = x_ref[0]                                           # (C, T), native dtype
    if use_vpu_squeeze:
        # Small C: VPU broadcast-multiply + sublane reduce; avoids an M=1 MXU
        # matvec that would use 1/128..1/256 of the MXU rows.
        s = jnp.sum(x.astype(jnp.float32) * ws_ref[...], axis=0, keepdims=True)
    else:
        # Large C: MXU matvec (bf16 feeds the MXU natively), f32 accumulate.
        s = jnp.dot(ws_ref[...], x, preferred_element_type=jnp.float32)
    # Spatial gate broadcasts over sublanes (channels), channel gate over lanes.
    gate = jax.nn.sigmoid(s) + g_ref[0]                    # (C, T) f32
    o_ref[0] = (x * gate.astype(x.dtype)).astype(o_ref.dtype)


def _round_up(x, m):
    return (x + m - 1) // m * m


def _tpu_caps():
    """(vmem_capacity_bytes, tensorcores_per_chip) with safe fallbacks."""
    vmem = 128 << 20
    cores = 1
    try:
        info = pltpu.get_tpu_info()
        v = getattr(info, "vmem_capacity_bytes", None)
        if v:
            vmem = int(v)
        for name in ("num_cores", "core_count", "num_tensorcores",
                     "tensorcores_per_chip"):
            c = getattr(info, name, None)
            if c:
                cores = int(c)
                break
    except Exception:
        pass
    return vmem, cores


def _pick_hw_tile(batch, channels, hw, itemsize, budget_bytes, num_cores):
    """Largest lane-dense (multiple-of-128) HW tile fitting the VMEM budget.

    No divisibility requirement: the grid uses ceil-div and Pallas masks the
    ragged final tile.  Returns (tile, n_tiles)."""
    hw_128 = _round_up(hw, 128)
    n_units = hw_128 // 128
    # Double-buffered in/out tiles + f32 gate temps, per lane column.
    per_col = channels * (5 * itemsize + 8)
    budget_units = max(1, budget_bytes // (per_col * 128))
    units = min(n_units, budget_units)
    # Multi-TensorCore chips (v7x): if the (batch, hw-tile) grid would only
    # have one point, split HW into two large tiles so both cores get work.
    if batch == 1 and num_cores >= 2 and units >= n_units and n_units >= 2:
        units = -(-n_units // 2)
    tile = 128 * units
    if tile >= hw:
        # One full-width block: the last block dim equals the full array dim,
        # so a non-multiple-of-128 HW needs no padding at all.
        return hw, 1
    return tile, -(-hw // tile)


def scse(x, ws, w1, b1, w2, b2, *, budget_bytes=None):
    """x: (B, C, H, W) NCHW.  ws: (1, C); w1: (Cr, C); b1: (Cr,);
    w2: (C, Cr); b2: (C,)  (PyTorch 1x1-conv weights squeezed)."""
    B, C, H, W = x.shape
    HW = H * W
    out_dtype = x.dtype
    itemsize = x.dtype.itemsize

    xr = x.reshape(B, C, HW)

    # ---- Channel gate (GAB squeeze path): tiny (B, C), precomputed in f32 ----
    m = jnp.mean(xr.astype(jnp.float32), axis=2)                      # (B, C)
    h = jnp.maximum(m @ w1.astype(jnp.float32).T
                    + b1.astype(jnp.float32)[None, :], 0.0)           # (B, Cr)
    g = jax.nn.sigmoid(h @ w2.astype(jnp.float32).T
                       + b2.astype(jnp.float32)[None, :])             # (B, C)
    g = g.reshape(B, C, 1)

    # ---- Generation-aware VMEM budgeting ----
    vmem_cap, num_cores = _tpu_caps()
    if budget_bytes is None:
        budget_bytes = min(vmem_cap // 3, 48 << 20)       # ~21 MiB v7x, ~42 MiB v5e/v6e
    vmem_limit = int(min(vmem_cap * 5 // 8, 96 << 20))    # ~40 MiB v7x, ~80 MiB v5e/v6e

    tile, n_t = _pick_hw_tile(B, C, HW, itemsize, budget_bytes, num_cores)

    # ---- Spatial-squeeze path selection (VPU for tiny C, MXU otherwise) ----
    use_vpu_squeeze = C <= (8 if itemsize >= 4 else 16)
    if use_vpu_squeeze:
        ws_arg = ws.reshape(C, 1).astype(jnp.float32)
        ws_spec = pl.BlockSpec((C, 1), lambda b, t: (0, 0))
    else:
        ws_arg = ws.reshape(1, C).astype(x.dtype)
        ws_spec = pl.BlockSpec((1, C), lambda b, t: (0, 0))

    cost = pl.CostEstimate(
        flops=4 * B * C * HW,
        transcendentals=B * HW,
        bytes_accessed=2 * B * C * HW * itemsize,
    )

    out = pl.pallas_call(
        functools.partial(scse_kernel, use_vpu_squeeze=use_vpu_squeeze),
        out_shape=jax.ShapeDtypeStruct((B, C, HW), out_dtype),
        grid=(B, n_t),
        in_specs=[
            pl.BlockSpec((1, C, tile), lambda b, t: (b, 0, t)),   # x tile
            ws_spec,                                               # spatial squeeze w
            pl.BlockSpec((1, C, 1), lambda b, t: (b, 0, 0)),       # channel gate
        ],
        out_specs=pl.BlockSpec((1, C, tile), lambda b, t: (b, 0, t)),
        compiler_params=pltpu.CompilerParams(
            dimension_semantics=("parallel", "parallel"),
            vmem_limit_bytes=vmem_limit,
        ),
        cost_estimate=cost,
    )(xr, ws_arg, g)

    return out.reshape(B, C, H, W)

    # TODO(synk): for very small C (< 8 f32) sublanes are underfilled; a
    # (B*C, HW)-packed layout with a block-diagonal spatial squeeze would
    # recover ~2x VPU/store utilization but is not implemented here.


def scse_reference(x, ws, w1, b1, w2, b2):
    """Pure-JAX reference mirroring the PyTorch forward (f32 math)."""
    B, C, H, W = x.shape
    xr = x.reshape(B, C, H * W).astype(jnp.float32)
    # spatial attention
    s = jax.nn.sigmoid(jnp.einsum("oc,bcn->bon", ws.astype(jnp.float32), xr,
                                  precision=jax.lax.Precision.HIGHEST))
    satt = xr * s
    # channel attention
    m = jnp.mean(xr, axis=2)
    h = jnp.maximum(m @ w1.astype(jnp.float32).T + b1.astype(jnp.float32)[None, :], 0.0)
    g = jax.nn.sigmoid(h @ w2.astype(jnp.float32).T + b2.astype(jnp.float32)[None, :])
    catt = xr * g[..., None]
    return (satt + catt).reshape(B, C, H, W).astype(x.dtype)


if __name__ == "__main__":
    def run_case(key, B, C, H, W, reduction=4, budget_bytes=None,
                 atol=1e-5, rtol=1e-5):
        Cr = max(1, C // reduction)
        kx, kws, kw1, kb1, kw2, kb2 = jax.random.split(key, 6)
        x = jax.random.normal(kx, (B, C, H, W), dtype=jnp.float32)
        # SpatialAttention2d.squeeze: Conv2d(C, 1, k=1, bias=False) -> (1, C)
        ws = jax.random.normal(kws, (1, C), dtype=jnp.float32) * 0.1
        # GAB.conv1: Conv2d(C, Cr, k=1) -> weight (Cr, C), bias (Cr,)
        w1 = jax.random.normal(kw1, (Cr, C), dtype=jnp.float32) * 0.1
        b1 = jax.random.normal(kb1, (Cr,), dtype=jnp.float32) * 0.1
        # GAB.conv2: Conv2d(Cr, C, k=1) -> weight (C, Cr), bias (C,)
        w2 = jax.random.normal(kw2, (C, Cr), dtype=jnp.float32) * 0.1
        b2 = jax.random.normal(kb2, (C,), dtype=jnp.float32) * 0.1

        out = jax.block_until_ready(
            scse(x, ws, w1, b1, w2, b2, budget_bytes=budget_bytes))
        ref = scse_reference(x, ws, w1, b1, w2, b2)
        assert out.shape == (B, C, H, W)
        assert jnp.allclose(out, ref, atol=atol, rtol=rtol), "mismatch vs reference"

    key = jax.random.PRNGKey(0)
    k1, k2, k3, k4 = jax.random.split(key, 4)
    # HW = 256: lane-dense, single full tile per batch element.
    run_case(k1, 2, 4, 16, 16)
    # HW = 100: non-128-multiple, single full-width (unpadded) block, B = 1.
    run_case(k2, 1, 4, 10, 10)
    # HW = 400 with a tiny forced budget: exercises the cdiv grid with a
    # ragged, masked final tile (tile = 128, n_t = 4).
    run_case(k3, 1, 4, 20, 20, budget_bytes=4 * 1024)
    # C = 32: exercises the MXU-dot squeeze path (looser tolerance since the
    # MXU matvec may use a different f32 pass scheme than the XLA reference).
    run_case(k4, 2, 32, 12, 12, atol=1e-2, rtol=1e-2)

    print("KERNEL_OK")
</pallas_src>

<mosaic_0001>
module attributes {stable_mosaic.version = 11 : i64} {
  func.func @scse_kernel(%arg0: i32, %arg1: i32, %arg2: memref<1x4x256xf32, #tpu.memory_space<vmem>>, %arg3: memref<4x1xf32, #tpu.memory_space<vmem>>, %arg4: memref<1x4x1xf32, #tpu.memory_space<vmem>>, %arg5: memref<1x4x256xf32, #tpu.memory_space<vmem>>) attributes {dimension_semantics = [#tpu.dimension_semantics<parallel>, #tpu.dimension_semantics<parallel>], iteration_bounds = array<i64: 2, 1>, scalar_prefetch = 0 : i64, scratch_operands = 0 : i64, tpu.core_type = #tpu.core_type<tc>, window_params = [{transform_indices = @transform_0, window_bounds = array<i64: 1, 4, 256>}, {pipeline_mode = #tpu.pipeline_mode<synchronous>, transform_indices = @transform_1, window_bounds = array<i64: 4, 1>}, {transform_indices = @transform_2, window_bounds = array<i64: 1, 4, 1>}, {transform_indices = @transform_3, window_bounds = array<i64: 1, 4, 256>}]} {
    %c0 = arith.constant 0 : index
    %c0_0 = arith.constant 0 : index
    %c0_1 = arith.constant 0 : index
    %0 = vector.load %arg2[%c0, %c0_0, %c0_1] : memref<1x4x256xf32, #tpu.memory_space<vmem>>, vector<1x4x256xf32>
    %1 = vector.shape_cast %0 : vector<1x4x256xf32> to vector<4x256xf32>
    %c0_2 = arith.constant 0 : index
    %c0_3 = arith.constant 0 : index
    %2 = vector.load %arg3[%c0_2, %c0_3] : memref<4x1xf32, #tpu.memory_space<vmem>>, vector<4x1xf32>
    %3 = vector.broadcast %2 : vector<4x1xf32> to vector<4x256xf32>
    %4 = arith.mulf %1, %3 : vector<4x256xf32>
    %cst = arith.constant dense<0.000000e+00> : vector<256xf32>
    %5 = vector.multi_reduction <add>, %4, %cst [0] : vector<4x256xf32> to vector<256xf32>
    %6 = vector.shape_cast %5 : vector<256xf32> to vector<1x256xf32>
    %7 = arith.negf %6 : vector<1x256xf32>
    %8 = math.exp %7 : vector<1x256xf32>
    %cst_4 = arith.constant 1.000000e+00 : f32
    %9 = vector.broadcast %cst_4 : f32 to vector<1x256xf32>
    %10 = arith.addf %9, %8 : vector<1x256xf32>
    %11 = arith.divf %9, %10 : vector<1x256xf32>
    %c0_5 = arith.constant 0 : index
    %c0_6 = arith.constant 0 : index
    %c0_7 = arith.constant 0 : index
    %12 = vector.load %arg4[%c0_5, %c0_6, %c0_7] : memref<1x4x1xf32, #tpu.memory_space<vmem>>, vector<1x4x1xf32>
    %13 = vector.shape_cast %12 : vector<1x4x1xf32> to vector<4x1xf32>
    %14 = vector.broadcast %11 : vector<1x256xf32> to vector<4x256xf32>
    %15 = vector.broadcast %13 : vector<4x1xf32> to vector<4x256xf32>
    %16 = arith.addf %14, %15 : vector<4x256xf32>
    %17 = arith.mulf %1, %16 : vector<4x256xf32>
    %c0_8 = arith.constant 0 : index
    %c0_9 = arith.constant 0 : index
    %c0_10 = arith.constant 0 : index
    %18 = vector.load %arg5[%c0_8, %c0_9, %c0_10] : memref<1x4x256xf32, #tpu.memory_space<vmem>>, vector<1x4x256xf32>
    %19 = vector.shape_cast %18 : vector<1x4x256xf32> to vector<4x256xf32>
    %20 = vector.shape_cast %17 : vector<4x256xf32> to vector<1x4x256xf32>
    tpu.vector_store %arg5[%c0_8, %c0_9, %c0_10], %20 {strides = array<i32>} : memref<1x4x256xf32, #tpu.memory_space<vmem>>, vector<1x4x256xf32>,
    return
  }
  func.func @transform_0(%arg0: i32, %arg1: i32) -> (i32, i32, i32) {
    %c0_i32 = arith.constant 0 : i32
    %c0_i32_0 = arith.constant 0 : i32
    return %arg0, %c0_i32, %arg1 : i32, i32, i32
  }
  func.func @transform_1(%arg0: i32, %arg1: i32) -> (i32, i32) {
    %c0_i32 = arith.constant 0 : i32
    %c0_i32_0 = arith.constant 0 : i32
    %c0_i32_1 = arith.constant 0 : i32
    return %c0_i32, %c0_i32_0 : i32, i32
  }
  func.func @transform_2(%arg0: i32, %arg1: i32) -> (i32, i32, i32) {
    %c0_i32 = arith.constant 0 : i32
    %c0_i32_0 = arith.constant 0 : i32
    %c0_i32_1 = arith.constant 0 : i32
    return %arg0, %c0_i32, %c0_i32_0 : i32, i32, i32
  }
  func.func @transform_3(%arg0: i32, %arg1: i32) -> (i32, i32, i32) {
    %c0_i32 = arith.constant 0 : i32
    %c0_i32_0 = arith.constant 0 : i32
    return %arg0, %c0_i32, %arg1 : i32, i32, i32
  }
}

</mosaic_0001>

<llo_original>
// kernel: tpu_custom_call.1
$region0: #{tpu_custom_call.1}
  #allocation0 [shape = 'u32[]', space=smem, size = 0x4, offset = 0x4, fixed_abs, tag = 'smem constant byte address 0x4 - core index']
  #allocation1 [shape = 'u32[72,128]{1,0:T(1,128)}', space=vmem, size = 0x9000, scoped, tag = 'internal scratch']
  %s0 = inlined_call_operand.hbm [shape: f32[2,4,256], index: 0, kind: input, shape index: {}]
  %s1 = inlined_call_operand.vmem [shape: f32[4,1], index: 1, kind: input, shape index: {}]
  %s2 = inlined_call_operand.vmem [shape: f32[2,4,1], index: 2, kind: input, shape index: {}]
  %s3 = inlined_call_operand.hbm [shape: f32[2,4,256], index: 3, kind: output, shape index: {}]
  %s4 = sld [smem:[#allocation0]]
  $region49: #{tpu_custom_call.1} parent=0
    _
  %s6 = ssub.s32 1, %s4
  %s7 = scalar_select 0, %s6, %s4
  $region1: #{tpu_custom_call.1} parent=0
    #allocation2 [shape = 'u8[8192]{0}', space=vmem, size = 0x2000, scoped, tag = 'input window, operand 0']
    #allocation3 [shape = 's32[2]{0}', space=sflag, size = 0x8, scoped, tag = 'scoped memory for tpu_custom_call.1']
    #allocation4 [shape = 's32[2]{0}', space=sflag, size = 0x8, scoped, tag = 'scoped memory for tpu_custom_call.1']
    #allocation5 [shape = 'u8[8192]{0}', space=vmem, size = 0x2000, scoped, tag = 'output window, operand 0']
    %8 = vsyncpa [#allocation3], 0
    %s9 = scalar_lea.sflag [#allocation3], 1
    %10 = vsyncpa %s9, 0
    %11 = vsyncpa [#allocation4], 0
    %s12 = scalar_lea.sflag [#allocation4], 1
    %13 = vsyncpa %s12, 0
    loop: start=0, step=1, limit=4
    $region2: #{tpu_custom_call.1} parent=1 // loop_pre_header
      _
    $region3: #{tpu_custom_call.1} parent=1 // loop_header
      %s15 = sphi 0, %s19
      %p16 = scmp.ge.s32.totalorder %s15, 4
      %s22 = sphi 0, %s34
      %s23 = sphi 0, %s30
      %s24 = sphi 0, %s22
      %s25 = sphi 0, %s23
      %s26 = sphi 0, %s24
      %s27 = sphi 0, %s25
      %s39 = sphi 0, %s41
      %s42 = sphi 0, %s39
      %s43 = sphi 0, %s42
      %s59 = sphi 0, %s43
      %s63 = sphi 0, %s63
      %s65 = sphi 0, %s63
      %s66 = sphi 0, %s65
      %s80 = sphi 0, %s66
      %s86 = sphi 0, %s88
      %s89 = sphi 0, %s86
      %s90 = sphi 0, %s89
      %s106 = sphi 0, %s90
      %s114 = sphi 0, %s116
      %s117 = sphi 0, %s114
      %s118 = sphi 0, %s117
      %s134 = sphi 0, %s118
    $region4: #{tpu_custom_call.1} parent=1 // loop_header_branch
      %18 = sbr.rel (%p16) target = $region8
    $region5: #{tpu_custom_call.1} parent=1 // loop_body
      %s20 = ssub.s32 %s15, 1
      %s21 = ssub.s32 %s15, 2
      %s28 = sadd.s32 1, %s23
      %p29 = scmp.ge.s32.totalorder %s28, 1
      %s30 = scalar_select %p29, 0, %s28
      %s31 = sadd.s32 1, %s22
      %s32 = scalar_select %p29, %s31, %s22
      %p33 = scmp.ge.s32.totalorder %s32, 2
      %s34 = scalar_select %p33, 0, %s32
      %s35 = ssub.s32 %s22, %s34
      %s36 = ssub.s32 %s23, %s30
      %s37 = sor.u32 %s35, %s36
      %p38 = scmp.eq.s32.totalorder %s37, 0
      %s40 = sadd.s32 %s39, 1
      %s41 = scalar_select %p38, %s39, %s40
      %p44 = pneg %p38
      %p45 = scmp.eq.s32.totalorder %s15, 1
      %p46 = por %p44, %p45
      %p47 = scmp.ne.s32.totalorder %s39, %s42
      %p48 = scmp.eq.s32.totalorder %s15, 0
      %p49 = por %p47, %p48
      %p50 = scmp.ne.s32.totalorder %s39, %s42
      %p51 = scmp.eq.s32.totalorder %s20, 1
      %p52 = por %p50, %p51
      %p53 = scmp.ne.s32.totalorder %s42, %s43
      %p54 = scmp.eq.s32.totalorder %s20, 0
      %p55 = por %p53, %p54
      %p56 = scmp.ne.s32.totalorder %s42, %s43
      %p57 = scmp.eq.s32.totalorder %s21, 1
      %p58 = por %p56, %p57
      %p60 = scmp.ne.s32.totalorder %s43, %s59
      %p61 = scmp.eq.s32.totalorder %s21, 0
      %p62 = por %p60, %p61
      %s64 = sadd.s32 %s63, 1
      %p67 = scmp.eq.s32.totalorder %s15, 1
      %p68 = scmp.ne.s32.totalorder %s63, %s65
      %p69 = scmp.eq.s32.totalorder %s15, 0
      %p70 = por %p68, %p69
      %p71 = scmp.ne.s32.totalorder %s63, %s65
      %p72 = scmp.eq.s32.totalorder %s20, 1
      %p73 = por %p71, %p72
      %p74 = scmp.ne.s32.totalorder %s65, %s66
      %p75 = scmp.eq.s32.totalorder %s20, 0
      %p76 = por %p74, %p75
      %p77 = scmp.ne.s32.totalorder %s65, %s66
      %p78 = scmp.eq.s32.totalorder %s21, 1
      %p79 = por %p77, %p78
      %p81 = scmp.ne.s32.totalorder %s66, %s80
      %p82 = scmp.eq.s32.totalorder %s21, 0
      %p83 = por %p81, %p82
      %s84 = ssub.s32 %s22, %s34
      %p85 = scmp.eq.s32.totalorder %s84, 0
      %s87 = sadd.s32 %s86, 1
      %s88 = scalar_select %p85, %s86, %s87
      %p91 = pneg %p85
      %p92 = scmp.eq.s32.totalorder %s15, 1
      %p93 = por %p91, %p92
      %p94 = scmp.ne.s32.totalorder %s86, %s89
      %p95 = scmp.eq.s32.totalorder %s15, 0
      %p96 = por %p94, %p95
      %p97 = scmp.ne.s32.totalorder %s86, %s89
      %p98 = scmp.eq.s32.totalorder %s20, 1
      %p99 = por %p97, %p98
      %p100 = scmp.ne.s32.totalorder %s89, %s90
      %p101 = scmp.eq.s32.totalorder %s20, 0
      %p102 = por %p100, %p101
      %p103 = scmp.ne.s32.totalorder %s89, %s90
      %p104 = scmp.eq.s32.totalorder %s21, 1
      %p105 = por %p103, %p104
      %p107 = scmp.ne.s32.totalorder %s90, %s106
      %p108 = scmp.eq.s32.totalorder %s21, 0
      %p109 = por %p107, %p108
      %s110 = ssub.s32 %s22, %s34
      %s111 = ssub.s32 %s23, %s30
      %s112 = sor.u32 %s110, %s111
      %p113 = scmp.eq.s32.totalorder %s112, 0
      %s115 = sadd.s32 %s114, 1
      %s116 = scalar_select %p113, %s114, %s115
      %p119 = pneg %p113
      %p120 = scmp.eq.s32.totalorder %s15, 1
      %p121 = por %p119, %p120
      %p122 = scmp.ne.s32.totalorder %s114, %s117
      %p123 = scmp.eq.s32.totalorder %s15, 0
      %p124 = por %p122, %p123
      %p125 = scmp.ne.s32.totalorder %s114, %s117
      %p126 = scmp.eq.s32.totalorder %s20, 1
      %p127 = por %p125, %p126
      %p128 = scmp.ne.s32.totalorder %s117, %s118
      %p129 = scmp.eq.s32.totalorder %s20, 0
      %p130 = por %p128, %p129
      %p131 = scmp.ne.s32.totalorder %s117, %s118
      %p132 = scmp.eq.s32.totalorder %s21, 1
      %p133 = por %p131, %p132
      %p135 = scmp.ne.s32.totalorder %s118, %s134
      %p136 = scmp.eq.s32.totalorder %s21, 0
      %p137 = por %p135, %p136
      %p138 = scmp.le.s32.totalorder 1, %s15
      %p139 = scmp.lt.s32.totalorder %s15, 3
      %p140 = pnand %p138, %p139
      %p141 = pneg %p140
      // Predicated region
      $region9: #{tpu_custom_call.1} parent=5 // pred_check
        _
      $region10: #{tpu_custom_call.1} parent=5 // pred_check_branch
        %143 = sbr.rel (%p140) target = $region12
      $region11: #{tpu_custom_call.1} parent=5 // pred_region
        %s144 = ssub.s32 %s15, 1
        // Predicated region
        $region13: #{tpu_custom_call.1} parent=11 // pred_check
          %p145 = pneg %p76
        $region14: #{tpu_custom_call.1} parent=11 // pred_check_branch
          %147 = sbr.rel (%p145) target = $region16
        $region15: #{tpu_custom_call.1} parent=11 // pred_region
          _
        $region16: #{tpu_custom_call.1} parent=11 // pred_fallthru
          _
      $region12: #{tpu_custom_call.1} parent=5 // pred_fallthru
        _
      %p148 = scmp.lt.s32.totalorder %s15, 2
      // Predicated region
      $region17: #{tpu_custom_call.1} parent=5 // pred_check
        %p149 = pneg %p148
      $region18: #{tpu_custom_call.1} parent=5 // pred_check_branch
        %151 = sbr.rel (%p149) target = $region20
      $region19: #{tpu_custom_call.1} parent=5 // pred_region
        // Predicated region
        $region21: #{tpu_custom_call.1} parent=19 // pred_check
          %p152 = pneg %p49
        $region22: #{tpu_custom_call.1} parent=19 // pred_check_branch
          %154 = sbr.rel (%p152) target = $region24
        $region23: #{tpu_custom_call.1} parent=19 // pred_region
          %s155 = sand.u32 %s39, 1
          %s156 = scalar_lea.sflag [#allocation3], %s155
          %s157 = sand.u32 %s39, 1
          %s158 = smul.addr %s157, 8
          %s159 = scalar_lea.vmem [#allocation2], %s158
          %s160 = smul.u32 2, %s23
          %162 = vsyncadd %s156, 0
          %s163 = smul.addr %s22, 2
          %s164 = sadd.s32 %s160, %s163
          %s165 = smul.addr %s164, 4
          %s166 = scalar_lea.hbm %s0, %s165
          %s168 = sshll.u32 %s166, 4
          %s169 = int_to_ptr.hbm [resolvable:$true] %s168
          %s170 = sshll.u32 %s159, 4
          %s171 = int_to_ptr.vmem [resolvable:$true] %s170
          %173 = dma.hbm_to_vmem [thread:$0]  %s169, 128, %s171, %s156
        $region24: #{tpu_custom_call.1} parent=19 // pred_fallthru
          _
        // Predicated region
        $region25: #{tpu_custom_call.1} parent=19 // pred_check
          %p174 = pneg %p96
        $region26: #{tpu_custom_call.1} parent=19 // pred_check_branch
          %176 = sbr.rel (%p174) target = $region28
        $region27: #{tpu_custom_call.1} parent=19 // pred_region
          %p177 = scmp.lt.s32.totalorder %s22, 1
          %s178 = scalar_select %p177, %s22, 1
          %s179 = smul.addr %s178, 4
          %s180 = scalar_lea.vmem %s2, %s179
        $region28: #{tpu_custom_call.1} parent=19 // pred_fallthru
          _
      $region20: #{tpu_custom_call.1} parent=5 // pred_fallthru
        _
      %p181 = scmp.le.s32.totalorder 1, %s15
      %p182 = scmp.lt.s32.totalorder %s15, 3
      %p183 = pnand %p181, %p182
      %p184 = pneg %p183
      // Predicated region
      $region29: #{tpu_custom_call.1} parent=5 // pred_check
        _
      $region30: #{tpu_custom_call.1} parent=5 // pred_check_branch
        %186 = sbr.rel (%p183) target = $region32
      $region31: #{tpu_custom_call.1} parent=5 // pred_region
        %s187 = ssub.s32 %s15, 1
        %s188 = sand.u32 %s42, 1
        %s189 = scalar_lea.sflag [#allocation3], %s188
        %s190 = sand.u32 %s42, 1
        %s191 = smul.addr %s190, 8
        %s192 = scalar_lea.vmem [#allocation2], %s191
        // Predicated region
        $region33: #{tpu_custom_call.1} parent=31 // pred_check
          %p193 = pneg %p55
        $region34: #{tpu_custom_call.1} parent=31 // pred_check_branch
          %195 = sbr.rel (%p193) target = $region36
        $region35: #{tpu_custom_call.1} parent=31 // pred_region
          %197 = dma.done %s189, 128
        $region36: #{tpu_custom_call.1} parent=31 // pred_fallthru
          _
        %s198 = sand.u32 %s42, 1
        %s199 = scalar_lea.sflag [#allocation3], %s198
        %s200 = sand.u32 %s42, 1
        %s201 = smul.addr %s200, 8
        %s202 = scalar_lea.vmem [#allocation2], %s201
        %p203 = pneg %p55
        %p204 = pneg %p52
        %p205 = pneg %p76
        %p206 = pneg %p73
        %p207 = scmp.lt.s32.totalorder %s24, 1
        %s208 = scalar_select %p207, %s24, 1
        %s209 = smul.addr %s208, 4
        %s210 = scalar_lea.vmem %s2, %s209
        %p211 = pneg %p102
        %p212 = pneg %p99
        %p213 = pneg %p130
        %p214 = pneg %p127
        %s215 = sand.u32 %s117, 1
        %s216 = scalar_lea.sflag [#allocation4], %s215
        %s217 = sand.u32 %s117, 1
        %s218 = smul.addr %s217, 8
        %s219 = scalar_lea.vmem [#allocation5], %s218
        %s220 = smul.u32 2, %s25
        %p221 = scmp.lt.s32.totalorder %s24, 1
        %s222 = scalar_select %p221, %s24, 1
        %s223 = smul.addr %s222, 4
        %s224 = scalar_lea.vmem %s2, %s223
        %s225 = smul.u32 2, %s25
        %v226 = vld [vmem:[%s192] sm:$0xff]
        %v227 = vld [vmem:[%s1] sm:$0xf]
        %229 = vset.pattern.permute.xlu0 0
        %230 = vperm.xlu0 %229, %v227
        %v231 = vpop.permute.xlu0 %230
        %v233 = vunpack.c.l.s4 839922192
        %v234 = vunpack.c.0.s8 %v233
        %v235 = vperm.slane %v231, %v234
        %v237 = vmul.f32 %v226, %v235
        %239 = vst [vmem:[#allocation1] ss:$2 sm:$0xff] %v237
        %v240 = vld.sshfl [vmem:[#allocation1] sm:$0xff pattern:$0x75316420]
        %v241 = vld.sshfl [vmem:[#allocation1 + $0x8] sm:$0xff pattern:$0x75316420]
        %vm244 = vcmask 1043456
        %v245 = vsel %vm244, %v240, 0.0
        %v246 = vrot.slane %v245, 4
        %v247 = vadd.f32 %v245, %v246
        %v248 = vrot.slane %v247, 2
        %v249 = vadd.f32 %v247, %v248
        %v250 = vrot.slane %v249, 1
        %v251 = vadd.f32 %v249, %v250
        %v252 = vsel %vm244, %v241, 0.0
        %v253 = vrot.slane %v252, 4
        %v254 = vadd.f32 %v252, %v253
        %v255 = vrot.slane %v254, 2
        %v256 = vadd.f32 %v254, %v255
        %v257 = vrot.slane %v256, 1
        %v258 = vadd.f32 %v256, %v257
        %v259 = vxor.u32 %v251, 2147483648
        %v260 = vxor.u32 %v258, 2147483648
        %v261 = vmul.f32 %v259, 1.442695
        %v262 = vpow.pop %v261
        %v263 = vmul.f32 %v260, 1.442695
        %v264 = vpow.pop %v263
        %v265 = vadd.f32 %v262, 1.0
        %v266 = vadd.f32 %v264, 1.0
        %v267 = vrcp.pop %v265
        %v268 = vmul.f32 %v265, %v267
        %v269 = vsub.f32 1.0, %v268
        %v270 = vmul.f32 %v267, %v269
        %v271 = vadd.f32 %v267, %v270
        %vm272 = vweird.f32 %v265
        %vm273 = vweird.f32 %v267
        %vm274 = vmor %vm272, %vm273
        %v275 = vsel %vm274, %v267, %v271
        %v276 = vand.u32 2147483647, %v265
        %vm277 = vcmp.eq.f32.partialorder %v276, 8.507059e+37
        %v278 = vand.u32 %v265, 2147483648
        %v279 = vor.u32 1.1754944e-38, %v278
        %v280 = vsel %vm277, %v279, %v275
        %v281 = vmul.f32 1.0, %v280
        %v282 = vrcp.pop %v266
        %v283 = vmul.f32 %v266, %v282
        %v284 = vsub.f32 1.0, %v283
        %v285 = vmul.f32 %v282, %v284
        %v286 = vadd.f32 %v282, %v285
        %vm287 = vweird.f32 %v266
        %vm288 = vweird.f32 %v282
        %vm289 = vmor %vm287, %vm288
        %v290 = vsel %vm289, %v282, %v286
        %v291 = vand.u32 2147483647, %v266
        %vm292 = vcmp.eq.f32.partialorder %v291, 8.507059e+37
        %v293 = vand.u32 %v266, 2147483648
        %v294 = vor.u32 1.1754944e-38, %v293
        %v295 = vsel %vm292, %v294, %v290
        %v296 = vmul.f32 1.0, %v295
        %v297 = vld [vmem:[%s224] sm:$0xf]
        %299 = vset.pattern.permute.xlu0 0
        %300 = vperm.xlu0 %299, %v297
        %v301 = vpop.permute.xlu0 %300
        %v303 = vadd.f32 %v281, %v301
        %v304 = vadd.f32 %v296, %v301
        %v307 = vrot.slane %v304, 4
        %v308 = vsel %vm244, %v303, %v307
        %v310 = vmul.f32 %v226, %v308
        %311 = vst [vmem:[%s219] sm:$0xff] %v310
        %s312 = sand.u32 %s117, 1
        %s313 = scalar_lea.sflag [#allocation4], %s312
        %s314 = sand.u32 %s117, 1
        %s315 = smul.addr %s314, 8
        %s316 = scalar_lea.vmem [#allocation5], %s315
        // Predicated region
        $region37: #{tpu_custom_call.1} parent=31 // pred_check
          %p317 = pneg %p127
        $region38: #{tpu_custom_call.1} parent=31 // pred_check_branch
          %319 = sbr.rel (%p317) target = $region40
        $region39: #{tpu_custom_call.1} parent=31 // pred_region
          %s320 = smul.u32 2, %s25
          %322 = vsyncadd %s313, 0
          %s323 = smul.addr %s24, 2
          %s324 = sadd.s32 %s320, %s323
          %s325 = smul.addr %s324, 4
          %s326 = scalar_lea.hbm %s3, %s325
          %s328 = sshll.u32 %s316, 4
          %s329 = int_to_ptr.vmem [resolvable:$true] %s328
          %s330 = sshll.u32 %s326, 4
          %s331 = int_to_ptr.hbm [resolvable:$true] %s330
          %333 = dma.vmem_to_hbm [thread:$0]  %s329, 128, %s331, %s313
        $region40: #{tpu_custom_call.1} parent=31 // pred_fallthru
          _
      $region32: #{tpu_custom_call.1} parent=5 // pred_fallthru
        _
      %p334 = scmp.le.s32.totalorder 2, %s15
      // Predicated region
      $region41: #{tpu_custom_call.1} parent=5 // pred_check
        %p335 = pneg %p334
      $region42: #{tpu_custom_call.1} parent=5 // pred_check_branch
        %337 = sbr.rel (%p335) target = $region44
      $region43: #{tpu_custom_call.1} parent=5 // pred_region
        %s338 = ssub.s32 %s15, 2
        // Predicated region
        $region45: #{tpu_custom_call.1} parent=43 // pred_check
          %p339 = pneg %p133
        $region46: #{tpu_custom_call.1} parent=43 // pred_check_branch
          %341 = sbr.rel (%p339) target = $region48
        $region47: #{tpu_custom_call.1} parent=43 // pred_region
          %s342 = sand.u32 %s118, 1
          %s343 = scalar_lea.sflag [#allocation4], %s342
          %s344 = sand.u32 %s118, 1
          %s345 = smul.addr %s344, 8
          %s346 = scalar_lea.vmem [#allocation5], %s345
          %348 = dma.done %s343, 128
        $region48: #{tpu_custom_call.1} parent=43 // pred_fallthru
          _
      $region44: #{tpu_custom_call.1} parent=5 // pred_fallthru
        _
    $region6: #{tpu_custom_call.1} parent=1 // loop_footer
      %s19 = sadd.s32 1, %s15
    $region7: #{tpu_custom_call.1} parent=1 // loop_footer_branch
      %14 = sbr.rel target = $region3
    $region8: #{tpu_custom_call.1} parent=1 // loop_exit
      _
    %349 = vsyncpa [#allocation3], 1
    %s350 = scalar_lea.sflag [#allocation3], 1
    %351 = vsyncpa %s350, 1
    %352 = vsyncpa [#allocation4], 1
    %s353 = scalar_lea.sflag [#allocation4], 1
    %354 = vsyncpa %s353, 1

</llo_original>
